<compile_context>
chip_gen: v7x
topology: tpu7x:2x2x1
jax: 0.10.0
libtpu: 0.0.40
codegen_flags: <defaults>
</compile_context>

<pallas_src>
import jax
import jax.numpy as jnp
from jax.experimental import pallas as pl
from jax.experimental.pallas import tpu as pltpu

D_IN = 32
D_OUT = 16
HIDDEN = (256, 128, 128, 64)
BATCH = 8

_HI = jax.lax.Precision.HIGHEST


def affine_logsoftmax_kernel(x_ref, w_ref, b_ref, o_ref):
    # Single MXU pass: (BATCH, D_IN) @ (D_IN, D_OUT), f32 accumulate, highest
    # precision to avoid bf16 multi-pass lowering drift.
    logits = jax.lax.dot_general(
        x_ref[...], w_ref[...],
        dimension_numbers=(((1,), (0,)), ((), ())),
        preferred_element_type=jnp.float32,
        precision=_HI,
    ) + b_ref[...]
    # LogSoftmax over dim=0 (the batch axis), numerically stable, f32 on VPU/EUP.
    m = jnp.max(logits, axis=0, keepdims=True)
    s = logits - m
    lse = jnp.log(jnp.sum(jnp.exp(s), axis=0, keepdims=True))
    o_ref[...] = s - lse


def compose_params(params):
    """Fold the activation-free Linear chain into one (D_IN, D_OUT) weight and
    a (BATCH, D_OUT) pre-broadcast bias.  Input-independent; done once."""
    (w1, b1), (w2, b2), (w3, b3), (w4, b4), (w5, b5) = params
    w_total = w1
    for w in (w2, w3, w4, w5):
        w_total = jnp.matmul(w_total, w, precision=_HI)          # (D_IN, D_OUT)
    b_total = b1
    for w, b in ((w2, b2), (w3, b3), (w4, b4), (w5, b5)):
        b_total = jnp.matmul(b_total, w, precision=_HI) + b      # (1, D_OUT)
    b_bcast = jnp.broadcast_to(b_total, (BATCH, D_OUT)).astype(jnp.float32)
    return w_total.astype(jnp.float32), b_bcast


def nn_forward(x, w_total, b_bcast):
    vmem_spec = pl.BlockSpec(memory_space=pltpu.MemorySpace.VMEM)
    batch = x.shape[0]
    bytes_accessed = 4 * (batch * D_IN + D_IN * D_OUT + 2 * batch * D_OUT)
    return pl.pallas_call(
        affine_logsoftmax_kernel,
        out_shape=jax.ShapeDtypeStruct((batch, D_OUT), jnp.float32),
        in_specs=[vmem_spec, vmem_spec, vmem_spec],
        out_specs=vmem_spec,
        cost_estimate=pl.CostEstimate(
            flops=2 * batch * D_IN * D_OUT,
            transcendentals=batch * D_OUT + D_OUT,   # exp per element + log per column
            bytes_accessed=bytes_accessed,
        ),
        # No grid: single-shot call (see header).  Scaling note: if BATCH ever
        # grows past the MXU row count, switch to a grid over batch with a
        # two-pass running-max/running-sum dim=0 log-softmax, or tile over the
        # (independent) output columns marked "parallel".
    )(x, w_total, b_bcast)


def init_linear(key, fan_in, fan_out):
    """PyTorch nn.Linear default init: U(-1/sqrt(fan_in), 1/sqrt(fan_in)).
    Stored as (in, out) so composition / kernel compute x @ W directly."""
    kw, kb = jax.random.split(key)
    bound = 1.0 / jnp.sqrt(float(fan_in))
    w = jax.random.uniform(kw, (fan_in, fan_out), jnp.float32, -bound, bound)
    b = jax.random.uniform(kb, (1, fan_out), jnp.float32, -bound, bound)
    return w, b


def make_params(key):
    dims = (D_IN,) + HIDDEN + (D_OUT,)
    keys = jax.random.split(key, len(dims) - 1)
    return [init_linear(k, dims[i], dims[i + 1]) for i, k in enumerate(keys)]


def reference_forward(x, params):
    """Faithful layer-by-layer reference matching the PyTorch module."""
    h = x
    for w, b in params:
        h = jnp.matmul(h, w, precision=_HI) + b
    m = jnp.max(h, axis=0, keepdims=True)
    s = h - m
    return s - jnp.log(jnp.sum(jnp.exp(s), axis=0, keepdims=True))


if __name__ == "__main__":
    key = jax.random.PRNGKey(0)
    k_x, k_p = jax.random.split(key)
    x = jax.random.normal(k_x, (BATCH, D_IN), jnp.float32)
    params = make_params(k_p)

    # One-time, input-independent weight/bias precomposition.
    w_total, b_bcast = compose_params(params)
    w_total = jax.block_until_ready(w_total)
    b_bcast = jax.block_until_ready(b_bcast)

    out = nn_forward(x, w_total, b_bcast)
    out = jax.block_until_ready(out)

    ref = reference_forward(x, params)
    assert out.shape == (BATCH, D_OUT)
    assert bool(jnp.allclose(out, ref, atol=1e-4, rtol=1e-4))
    print("KERNEL_OK")
</pallas_src>

<mosaic_0001>
module attributes {stable_mosaic.version = 11 : i64} {
  func.func @affine_logsoftmax_kernel(%arg0: memref<8x32xf32, #tpu.memory_space<vmem>>, %arg1: memref<32x16xf32, #tpu.memory_space<vmem>>, %arg2: memref<8x16xf32, #tpu.memory_space<vmem>>, %arg3: memref<8x16xf32, #tpu.memory_space<vmem>>) attributes {dimension_semantics = [], scalar_prefetch = 0 : i64, scratch_operands = 0 : i64, tpu.core_type = #tpu.core_type<tc>} {
    %c0 = arith.constant 0 : index
    %c0_0 = arith.constant 0 : index
    %0 = vector.load %arg0[%c0, %c0_0] : memref<8x32xf32, #tpu.memory_space<vmem>>, vector<8x32xf32>
    %c0_1 = arith.constant 0 : index
    %c0_2 = arith.constant 0 : index
    %1 = vector.load %arg1[%c0_1, %c0_2] : memref<32x16xf32, #tpu.memory_space<vmem>>, vector<32x16xf32>
    %cst = arith.constant dense<0.000000e+00> : vector<8x16xf32>
    %2 = tpu.matmul %0, %1, %cst {dimension_numbers = #tpu.dot_dimension_numbers<[1], [0], [0], [1], [0, 0, 1, 1], [], []>, precision = #tpu.contract_precision<fp32>} : vector<8x32xf32>, vector<32x16xf32>, vector<8x16xf32> -> vector<8x16xf32>
    %c0_3 = arith.constant 0 : index
    %c0_4 = arith.constant 0 : index
    %3 = vector.load %arg2[%c0_3, %c0_4] : memref<8x16xf32, #tpu.memory_space<vmem>>, vector<8x16xf32>
    %4 = arith.addf %2, %3 : vector<8x16xf32>
    %cst_5 = arith.constant dense<0xFF800000> : vector<16xf32>
    %5 = vector.multi_reduction <maximumf>, %4, %cst_5 [0] : vector<8x16xf32> to vector<16xf32>
    %6 = vector.shape_cast %5 : vector<16xf32> to vector<1x16xf32>
    %7 = vector.broadcast %6 : vector<1x16xf32> to vector<8x16xf32>
    %8 = arith.subf %4, %7 : vector<8x16xf32>
    %9 = math.exp %8 : vector<8x16xf32>
    %cst_6 = arith.constant dense<0.000000e+00> : vector<16xf32>
    %10 = vector.multi_reduction <add>, %9, %cst_6 [0] : vector<8x16xf32> to vector<16xf32>
    %11 = vector.shape_cast %10 : vector<16xf32> to vector<1x16xf32>
    %12 = math.log %11 : vector<1x16xf32>
    %13 = vector.broadcast %12 : vector<1x16xf32> to vector<8x16xf32>
    %14 = arith.subf %8, %13 : vector<8x16xf32>
    %c0_7 = arith.constant 0 : index
    %c0_8 = arith.constant 0 : index
    %15 = vector.load %arg3[%c0_7, %c0_8] : memref<8x16xf32, #tpu.memory_space<vmem>>, vector<8x16xf32>
    tpu.vector_store %arg3[%c0_7, %c0_8], %14 {strides = array<i32>} : memref<8x16xf32, #tpu.memory_space<vmem>>, vector<8x16xf32>,
    return
  }
}

</mosaic_0001>

<llo_original>
// kernel: tpu_custom_call.1
$region0: #{tpu_custom_call.1}
  #allocation0 [shape = 'u32[]', space=smem, size = 0x4, offset = 0x4, fixed_abs, tag = 'smem constant byte address 0x4 - core index']
  #allocation1 [shape = 'u32[144,128]{1,0:T(1,128)}', space=vmem, size = 0x12000, scoped, tag = 'internal scratch']
  %s0 = inlined_call_operand.vmem [shape: f32[8,32], index: 0, kind: input, shape index: {}]
  %s1 = inlined_call_operand.vmem [shape: f32[32,16], index: 1, kind: input, shape index: {}]
  %s2 = inlined_call_operand.vmem [shape: f32[8,16], index: 2, kind: input, shape index: {}]
  %s3 = inlined_call_operand.hbm [shape: f32[8,16], index: 3, kind: output, shape index: {}]
  %s4 = sld [smem:[#allocation0]]
  $region22: #{tpu_custom_call.1} parent=0
    _
  %s6 = ssub.s32 1, %s4
  %s7 = scalar_select 0, %s6, %s4
  $region1: #{tpu_custom_call.1} parent=0
    #allocation2 [shape = 'u8[4096]{0}', space=vmem, size = 0x1000, scoped, tag = 'output window, operand 0, single buffered']
    #allocation3 [shape = 's32[1]{0}', space=sflag, size = 0x4, scoped, tag = 'scoped memory for tpu_custom_call.1']
    %8 = vsyncpa [#allocation3], 0
    // Predicated region
    $region2: #{tpu_custom_call.1} parent=1 // pred_check
      _
    $region3: #{tpu_custom_call.1} parent=1 // pred_check_branch
      %10 = sbr.rel (0) target = $region5
    $region4: #{tpu_custom_call.1} parent=1 // pred_region
      _
    $region5: #{tpu_custom_call.1} parent=1 // pred_fallthru
      _
    // Predicated region
    $region6: #{tpu_custom_call.1} parent=1 // pred_check
      _
    $region7: #{tpu_custom_call.1} parent=1 // pred_check_branch
      %12 = sbr.rel (0) target = $region9
    $region8: #{tpu_custom_call.1} parent=1 // pred_region
      _
    $region9: #{tpu_custom_call.1} parent=1 // pred_fallthru
      _
    // Predicated region
    $region10: #{tpu_custom_call.1} parent=1 // pred_check
      _
    $region11: #{tpu_custom_call.1} parent=1 // pred_check_branch
      %14 = sbr.rel (0) target = $region13
    $region12: #{tpu_custom_call.1} parent=1 // pred_region
      _
    $region13: #{tpu_custom_call.1} parent=1 // pred_fallthru
      _
    %v15 = vld [vmem:[%s0] sm:$0xff]
    %v16 = vld [vmem:[%s1] sm:$0xff]
    %v17 = vld [vmem:[%s1 + $0x8] sm:$0xff]
    %v18 = vld [vmem:[%s1 + $0x10] sm:$0xff]
    %v19 = vld [vmem:[%s1 + $0x18] sm:$0xff]
    %v20 = vld [vmem:[%s2] sm:$0xff]
    %vm21 = vcmask 261120
    %v23 = vsel %vm21, %v15, 0
    %25 = vmatprep.subr.mxu0 0.0
    %v26 = vand.u32 %v16, 4294901760
    %27 = vmatpush1.msra.mxu0 %v26
    %28 = vmatprep.subr.mxu0 0.0
    %v29 = vand.u32 %v17, 4294901760
    %30 = vmatpush1.msra.mxu0 %v29
    %31 = vmatprep.subr.mxu0 0.0
    %v32 = vand.u32 %v18, 4294901760
    %33 = vmatpush1.msra.mxu0 %v32
    %34 = vmatprep.subr.mxu0 0.0
    %v35 = vand.u32 %v19, 4294901760
    %36 = vmatpush1.msra.mxu0 %v35
    %37 = vmatprep.subr.mxu0 0.0
    %38 = vmatpush1.msra.mxu0 0.0
    %39 = vmatprep.subr.mxu0 0.0
    %40 = vmatpush1.msra.mxu0 0.0
    %41 = vmatprep.subr.mxu0 0.0
    %42 = vmatpush1.msra.mxu0 0.0
    %43 = vmatprep.subr.mxu0 0.0
    %44 = vmatpush1.msra.mxu0 0.0
    %45 = vmatprep.subr.mxu0 0.0
    %46 = vmatpush1.msra.mxu0 0.0
    %47 = vmatprep.subr.mxu0 0.0
    %48 = vmatpush1.msra.mxu0 0.0
    %49 = vmatprep.subr.mxu0 0.0
    %50 = vmatpush1.msra.mxu0 0.0
    %51 = vmatprep.subr.mxu0 0.0
    %52 = vmatpush1.msra.mxu0 0.0
    %53 = vmatprep.subr.mxu0 0.0
    %54 = vmatpush1.msra.mxu0 0.0
    %55 = vmatprep.subr.mxu0 0.0
    %56 = vmatpush1.msra.mxu0 0.0
    %57 = vmatprep.subr.mxu0 0.0
    %58 = vmatpush1.msra.mxu0 0.0
    %59 = vmatprep.subr.mxu0 0.0
    %60 = vmatpush1.msra.mxu0 0.0
    %61 = vmatprep.subr.mxu0 0.0
    %62 = vmatpush1.msra.mxu0 0.0
    %63 = vmatprep.subr.mxu0 0.0
    %64 = vmatpush1.msra.mxu0 0.0
    %65 = vmatprep.subr.mxu0 0.0
    %66 = vmatpush1.msra.mxu0 0.0
    %67 = vmatprep.subr.mxu0 0.0
    %68 = vmatpush1.msra.mxu0 0.0
    %69 = vmatprep.subr.mxu0 0.0
    %70 = vmatpush1.msra.mxu0 0.0
    %71 = vmatprep.subr.mxu0 0.0
    %72 = vmatpush1.msra.mxu0 0.0
    %73 = vmatprep.subr.mxu0 0.0
    %74 = vmatpush1.msra.mxu0 0.0
    %75 = vmatprep.subr.mxu0 0.0
    %76 = vmatpush1.msra.mxu0 0.0
    %77 = vmatprep.subr.mxu0 0.0
    %78 = vmatpush1.msra.mxu0 0.0
    %79 = vmatprep.subr.mxu0 0.0
    %80 = vmatpush1.msra.mxu0 0.0
    %81 = vmatprep.subr.mxu0 0.0
    %82 = vmatpush1.msra.mxu0 0.0
    %83 = vmatprep.subr.mxu0 0.0
    %84 = vmatpush1.msra.mxu0 0.0
    %85 = vmatprep.subr.mxu0 0.0
    %86 = vmatpush1.msra.mxu0 0.0
    %87 = vmatprep.subr.mxu0 0.0
    %88 = vmatpush1.msra.mxu0 0.0
    %89 = vmatprep.subr.mxu0 0.0
    %90 = vmatpush1.msra.mxu0 0.0
    %91 = vmatprep.subr.mxu0 0.0
    %92 = vmatpush1.msra.mxu0 0.0
    %93 = vmatprep.mubr.f32.mxu0 0.0
    %v94 = vand.u32 %v23, 4294901760
    %v95 = vsub.f32 %v23, %v94
    %v96 = vand.u32 %v95, 4294901760
    %v97 = vsub.f32 %v95, %v96
    %v98 = vand.u32 %v97, 4294901760
    %99 = vmatmul.mubr.f32.gmra.mrb[0].mxu0 %v98
    %v100 = vpop.f32.mrb[0].mxu0
    %v101 = vadd.f32 %v20, %v100
    %v102 = vpop.f32.mrb[0].mxu0
    %103 = vdwg.mxu0
    %104 = vmatprep.subr.mxu0 0.0
    %v105 = vand.u32 %v16, 4294901760
    %v106 = vsub.f32 %v16, %v105
    %v107 = vand.u32 %v106, 4294901760
    %v108 = vsub.f32 %v106, %v107
    %v109 = vand.u32 %v108, 4294901760
    %110 = vmatpush1.msra.mxu0 %v109
    %111 = vmatprep.subr.mxu0 0.0
    %v112 = vand.u32 %v17, 4294901760
    %v113 = vsub.f32 %v17, %v112
    %v114 = vand.u32 %v113, 4294901760
    %v115 = vsub.f32 %v113, %v114
    %v116 = vand.u32 %v115, 4294901760
    %117 = vmatpush1.msra.mxu0 %v116
    %118 = vmatprep.subr.mxu0 0.0
    %v119 = vand.u32 %v18, 4294901760
    %v120 = vsub.f32 %v18, %v119
    %v121 = vand.u32 %v120, 4294901760
    %v122 = vsub.f32 %v120, %v121
    %v123 = vand.u32 %v122, 4294901760
    %124 = vmatpush1.msra.mxu0 %v123
    %125 = vmatprep.subr.mxu0 0.0
    %v126 = vand.u32 %v19, 4294901760
    %v127 = vsub.f32 %v19, %v126
    %v128 = vand.u32 %v127, 4294901760
    %v129 = vsub.f32 %v127, %v128
    %v130 = vand.u32 %v129, 4294901760
    %131 = vmatpush1.msra.mxu0 %v130
    %132 = vmatprep.subr.mxu0 0.0
    %133 = vmatpush1.msra.mxu0 0.0
    %134 = vmatprep.subr.mxu0 0.0
    %135 = vmatpush1.msra.mxu0 0.0
    %136 = vmatprep.subr.mxu0 0.0
    %137 = vmatpush1.msra.mxu0 0.0
    %138 = vmatprep.subr.mxu0 0.0
    %139 = vmatpush1.msra.mxu0 0.0
    %140 = vmatprep.subr.mxu0 0.0
    %141 = vmatpush1.msra.mxu0 0.0
    %142 = vmatprep.subr.mxu0 0.0
    %143 = vmatpush1.msra.mxu0 0.0
    %144 = vmatprep.subr.mxu0 0.0
    %145 = vmatpush1.msra.mxu0 0.0
    %146 = vmatprep.subr.mxu0 0.0
    %147 = vmatpush1.msra.mxu0 0.0
    %148 = vmatprep.subr.mxu0 0.0
    %149 = vmatpush1.msra.mxu0 0.0
    %150 = vmatprep.subr.mxu0 0.0
    %151 = vmatpush1.msra.mxu0 0.0
    %152 = vmatprep.subr.mxu0 0.0
    %153 = vmatpush1.msra.mxu0 0.0
    %154 = vmatprep.subr.mxu0 0.0
    %155 = vmatpush1.msra.mxu0 0.0
    %156 = vmatprep.subr.mxu0 0.0
    %157 = vmatpush1.msra.mxu0 0.0
    %158 = vmatprep.subr.mxu0 0.0
    %159 = vmatpush1.msra.mxu0 0.0
    %160 = vmatprep.subr.mxu0 0.0
    %161 = vmatpush1.msra.mxu0 0.0
    %162 = vmatprep.subr.mxu0 0.0
    %163 = vmatpush1.msra.mxu0 0.0
    %164 = vmatprep.subr.mxu0 0.0
    %165 = vmatpush1.msra.mxu0 0.0
    %166 = vmatprep.subr.mxu0 0.0
    %167 = vmatpush1.msra.mxu0 0.0
    %168 = vmatprep.subr.mxu0 0.0
    %169 = vmatpush1.msra.mxu0 0.0
    %170 = vmatprep.subr.mxu0 0.0
    %171 = vmatpush1.msra.mxu0 0.0
    %172 = vmatprep.subr.mxu0 0.0
    %173 = vmatpush1.msra.mxu0 0.0
    %174 = vmatprep.subr.mxu0 0.0
    %175 = vmatpush1.msra.mxu0 0.0
    %176 = vmatprep.subr.mxu0 0.0
    %177 = vmatpush1.msra.mxu0 0.0
    %178 = vmatprep.subr.mxu0 0.0
    %179 = vmatpush1.msra.mxu0 0.0
    %180 = vmatprep.subr.mxu0 0.0
    %181 = vmatpush1.msra.mxu0 0.0
    %182 = vmatprep.subr.mxu0 0.0
    %183 = vmatpush1.msra.mxu0 0.0
    %184 = vmatprep.subr.mxu0 0.0
    %185 = vmatpush1.msra.mxu0 0.0
    %186 = vmatprep.subr.mxu0 0.0
    %187 = vmatpush1.msra.mxu0 0.0
    %188 = vmatprep.mubr.f32.mxu0 0.0
    %v189 = vand.u32 %v23, 4294901760
    %190 = vmatmul.mubr.f32.gmra.mrb[0].mxu0 %v189
    %v191 = vpop.f32.mrb[0].mxu0
    %v192 = vadd.f32 %v101, %v191
    %v193 = vpop.f32.mrb[0].mxu0
    %194 = vdwg.mxu0
    %195 = vmatprep.subr.mxu0 0.0
    %v196 = vand.u32 %v16, 4294901760
    %v197 = vsub.f32 %v16, %v196
    %198 = vmatpush1.msra.mxu0 %v197
    %199 = vmatprep.subr.mxu0 0.0
    %v200 = vand.u32 %v17, 4294901760
    %v201 = vsub.f32 %v17, %v200
    %202 = vmatpush1.msra.mxu0 %v201
    %203 = vmatprep.subr.mxu0 0.0
    %v204 = vand.u32 %v18, 4294901760
    %v205 = vsub.f32 %v18, %v204
    %206 = vmatpush1.msra.mxu0 %v205
    %207 = vmatprep.subr.mxu0 0.0
    %v208 = vand.u32 %v19, 4294901760
    %v209 = vsub.f32 %v19, %v208
    %210 = vmatpush1.msra.mxu0 %v209
    %211 = vmatprep.subr.mxu0 0.0
    %212 = vmatpush1.msra.mxu0 0.0
    %213 = vmatprep.subr.mxu0 0.0
    %214 = vmatpush1.msra.mxu0 0.0
    %215 = vmatprep.subr.mxu0 0.0
    %216 = vmatpush1.msra.mxu0 0.0
    %217 = vmatprep.subr.mxu0 0.0
    %218 = vmatpush1.msra.mxu0 0.0
    %219 = vmatprep.subr.mxu0 0.0
    %220 = vmatpush1.msra.mxu0 0.0
    %221 = vmatprep.subr.mxu0 0.0
    %222 = vmatpush1.msra.mxu0 0.0
    %223 = vmatprep.subr.mxu0 0.0
    %224 = vmatpush1.msra.mxu0 0.0
    %225 = vmatprep.subr.mxu0 0.0
    %226 = vmatpush1.msra.mxu0 0.0
    %227 = vmatprep.subr.mxu0 0.0
    %228 = vmatpush1.msra.mxu0 0.0
    %229 = vmatprep.subr.mxu0 0.0
    %230 = vmatpush1.msra.mxu0 0.0
    %231 = vmatprep.subr.mxu0 0.0
    %232 = vmatpush1.msra.mxu0 0.0
    %233 = vmatprep.subr.mxu0 0.0
    %234 = vmatpush1.msra.mxu0 0.0
    %235 = vmatprep.subr.mxu0 0.0
    %236 = vmatpush1.msra.mxu0 0.0
    %237 = vmatprep.subr.mxu0 0.0
    %238 = vmatpush1.msra.mxu0 0.0
    %239 = vmatprep.subr.mxu0 0.0
    %240 = vmatpush1.msra.mxu0 0.0
    %241 = vmatprep.subr.mxu0 0.0
    %242 = vmatpush1.msra.mxu0 0.0
    %243 = vmatprep.subr.mxu0 0.0
    %244 = vmatpush1.msra.mxu0 0.0
    %245 = vmatprep.subr.mxu0 0.0
    %246 = vmatpush1.msra.mxu0 0.0
    %247 = vmatprep.subr.mxu0 0.0
    %248 = vmatpush1.msra.mxu0 0.0
    %249 = vmatprep.subr.mxu0 0.0
    %250 = vmatpush1.msra.mxu0 0.0
    %251 = vmatprep.subr.mxu0 0.0
    %252 = vmatpush1.msra.mxu0 0.0
    %253 = vmatprep.subr.mxu0 0.0
    %254 = vmatpush1.msra.mxu0 0.0
    %255 = vmatprep.subr.mxu0 0.0
    %256 = vmatpush1.msra.mxu0 0.0
    %257 = vmatprep.subr.mxu0 0.0
    %258 = vmatpush1.msra.mxu0 0.0
    %259 = vmatprep.subr.mxu0 0.0
    %260 = vmatpush1.msra.mxu0 0.0
    %261 = vmatprep.subr.mxu0 0.0
    %262 = vmatpush1.msra.mxu0 0.0
    %263 = vmatprep.subr.mxu0 0.0
    %264 = vmatpush1.msra.mxu0 0.0
    %265 = vmatprep.subr.mxu0 0.0
    %266 = vmatpush1.msra.mxu0 0.0
    %267 = vmatprep.mubr.f32.mxu0 0.0
    %v268 = vand.u32 %v23, 4294901760
    %v269 = vsub.f32 %v23, %v268
    %270 = vmatmul.mubr.f32.gmra.mrb[0].mxu0 %v269
    %v271 = vpop.f32.mrb[0].mxu0
    %v272 = vadd.f32 %v192, %v271
    %v273 = vpop.f32.mrb[0].mxu0
    %274 = vdwg.mxu0
    %275 = vmatprep.subr.mxu0 0.0
    %v276 = vand.u32 %v16, 4294901760
    %277 = vmatpush1.msra.mxu0 %v276
    %278 = vmatprep.subr.mxu0 0.0
    %v279 = vand.u32 %v17, 4294901760
    %280 = vmatpush1.msra.mxu0 %v279
    %281 = vmatprep.subr.mxu0 0.0
    %v282 = vand.u32 %v18, 4294901760
    %283 = vmatpush1.msra.mxu0 %v282
    %284 = vmatprep.subr.mxu0 0.0
    %v285 = vand.u32 %v19, 4294901760
    %286 = vmatpush1.msra.mxu0 %v285
    %287 = vmatprep.subr.mxu0 0.0
    %288 = vmatpush1.msra.mxu0 0.0
    %289 = vmatprep.subr.mxu0 0.0
    %290 = vmatpush1.msra.mxu0 0.0
    %291 = vmatprep.subr.mxu0 0.0
    %292 = vmatpush1.msra.mxu0 0.0
    %293 = vmatprep.subr.mxu0 0.0
    %294 = vmatpush1.msra.mxu0 0.0
    %295 = vmatprep.subr.mxu0 0.0
    %296 = vmatpush1.msra.mxu0 0.0
    %297 = vmatprep.subr.mxu0 0.0
    %298 = vmatpush1.msra.mxu0 0.0
    %299 = vmatprep.subr.mxu0 0.0
    %300 = vmatpush1.msra.mxu0 0.0
    %301 = vmatprep.subr.mxu0 0.0
    %302 = vmatpush1.msra.mxu0 0.0
    %303 = vmatprep.subr.mxu0 0.0
    %304 = vmatpush1.msra.mxu0 0.0
    %305 = vmatprep.subr.mxu0 0.0
    %306 = vmatpush1.msra.mxu0 0.0
    %307 = vmatprep.subr.mxu0 0.0
    %308 = vmatpush1.msra.mxu0 0.0
    %309 = vmatprep.subr.mxu0 0.0
    %310 = vmatpush1.msra.mxu0 0.0
    %311 = vmatprep.subr.mxu0 0.0
    %312 = vmatpush1.msra.mxu0 0.0
    %313 = vmatprep.subr.mxu0 0.0
    %314 = vmatpush1.msra.mxu0 0.0
    %315 = vmatprep.subr.mxu0 0.0
    %316 = vmatpush1.msra.mxu0 0.0
    %317 = vmatprep.subr.mxu0 0.0
    %318 = vmatpush1.msra.mxu0 0.0
    %319 = vmatprep.subr.mxu0 0.0
    %320 = vmatpush1.msra.mxu0 0.0
    %321 = vmatprep.subr.mxu0 0.0
    %322 = vmatpush1.msra.mxu0 0.0
    %323 = vmatprep.subr.mxu0 0.0
    %324 = vmatpush1.msra.mxu0 0.0
    %325 = vmatprep.subr.mxu0 0.0
    %326 = vmatpush1.msra.mxu0 0.0
    %327 = vmatprep.subr.mxu0 0.0
    %328 = vmatpush1.msra.mxu0 0.0
    %329 = vmatprep.subr.mxu0 0.0
    %330 = vmatpush1.msra.mxu0 0.0
    %331 = vmatprep.subr.mxu0 0.0
    %332 = vmatpush1.msra.mxu0 0.0
    %333 = vmatprep.subr.mxu0 0.0
    %334 = vmatpush1.msra.mxu0 0.0
    %335 = vmatprep.subr.mxu0 0.0
    %336 = vmatpush1.msra.mxu0 0.0
    %337 = vmatprep.subr.mxu0 0.0
    %338 = vmatpush1.msra.mxu0 0.0
    %339 = vmatprep.subr.mxu0 0.0
    %340 = vmatpush1.msra.mxu0 0.0
    %341 = vmatprep.subr.mxu0 0.0
    %342 = vmatpush1.msra.mxu0 0.0
    %343 = vmatprep.mubr.f32.mxu0 0.0
    %v344 = vand.u32 %v23, 4294901760
    %v345 = vsub.f32 %v23, %v344
    %v346 = vand.u32 %v345, 4294901760
    %347 = vmatmul.mubr.f32.gmra.mrb[0].mxu0 %v346
    %v348 = vpop.f32.mrb[0].mxu0
    %v349 = vadd.f32 %v272, %v348
    %v350 = vpop.f32.mrb[0].mxu0
    %351 = vdwg.mxu0
    %352 = vmatprep.subr.mxu0 0.0
    %v353 = vand.u32 %v16, 4294901760
    %v354 = vsub.f32 %v16, %v353
    %v355 = vand.u32 %v354, 4294901760
    %356 = vmatpush1.msra.mxu0 %v355
    %357 = vmatprep.subr.mxu0 0.0
    %v358 = vand.u32 %v17, 4294901760
    %v359 = vsub.f32 %v17, %v358
    %v360 = vand.u32 %v359, 4294901760
    %361 = vmatpush1.msra.mxu0 %v360
    %362 = vmatprep.subr.mxu0 0.0
    %v363 = vand.u32 %v18, 4294901760
    %v364 = vsub.f32 %v18, %v363
    %v365 = vand.u32 %v364, 4294901760
    %366 = vmatpush1.msra.mxu0 %v365
    %367 = vmatprep.subr.mxu0 0.0
    %v368 = vand.u32 %v19, 4294901760
    %v369 = vsub.f32 %v19, %v368
    %v370 = vand.u32 %v369, 4294901760
    %371 = vmatpush1.msra.mxu0 %v370
    %372 = vmatprep.subr.mxu0 0.0
    %373 = vmatpush1.msra.mxu0 0.0
    %374 = vmatprep.subr.mxu0 0.0
    %375 = vmatpush1.msra.mxu0 0.0
    %376 = vmatprep.subr.mxu0 0.0
    %377 = vmatpush1.msra.mxu0 0.0
    %378 = vmatprep.subr.mxu0 0.0
    %379 = vmatpush1.msra.mxu0 0.0
    %380 = vmatprep.subr.mxu0 0.0
    %381 = vmatpush1.msra.mxu0 0.0
    %382 = vmatprep.subr.mxu0 0.0
    %383 = vmatpush1.msra.mxu0 0.0
    %384 = vmatprep.subr.mxu0 0.0
    %385 = vmatpush1.msra.mxu0 0.0
    %386 = vmatprep.subr.mxu0 0.0
    %387 = vmatpush1.msra.mxu0 0.0
    %388 = vmatprep.subr.mxu0 0.0
    %389 = vmatpush1.msra.mxu0 0.0
    %390 = vmatprep.subr.mxu0 0.0
    %391 = vmatpush1.msra.mxu0 0.0
    %392 = vmatprep.subr.mxu0 0.0
    %393 = vmatpush1.msra.mxu0 0.0
    %394 = vmatprep.subr.mxu0 0.0
    %395 = vmatpush1.msra.mxu0 0.0
    %396 = vmatprep.subr.mxu0 0.0
    %397 = vmatpush1.msra.mxu0 0.0
    %398 = vmatprep.subr.mxu0 0.0
    %399 = vmatpush1.msra.mxu0 0.0
    %400 = vmatprep.subr.mxu0 0.0
    %401 = vmatpush1.msra.mxu0 0.0
    %402 = vmatprep.subr.mxu0 0.0
    %403 = vmatpush1.msra.mxu0 0.0
    %404 = vmatprep.subr.mxu0 0.0
    %405 = vmatpush1.msra.mxu0 0.0
    %406 = vmatprep.subr.mxu0 0.0
    %407 = vmatpush1.msra.mxu0 0.0
    %408 = vmatprep.subr.mxu0 0.0
    %409 = vmatpush1.msra.mxu0 0.0
    %410 = vmatprep.subr.mxu0 0.0
    %411 = vmatpush1.msra.mxu0 0.0
    %412 = vmatprep.subr.mxu0 0.0
    %413 = vmatpush1.msra.mxu0 0.0
    %414 = vmatprep.subr.mxu0 0.0
    %415 = vmatpush1.msra.mxu0 0.0
    %416 = vmatprep.subr.mxu0 0.0
    %417 = vmatpush1.msra.mxu0 0.0
    %418 = vmatprep.subr.mxu0 0.0
    %419 = vmatpush1.msra.mxu0 0.0
    %420 = vmatprep.subr.mxu0 0.0
    %421 = vmatpush1.msra.mxu0 0.0
    %422 = vmatprep.subr.mxu0 0.0
    %423 = vmatpush1.msra.mxu0 0.0
    %424 = vmatprep.subr.mxu0 0.0
    %425 = vmatpush1.msra.mxu0 0.0
    %426 = vmatprep.subr.mxu0 0.0
    %427 = vmatpush1.msra.mxu0 0.0
    %428 = vmatprep.mubr.f32.mxu0 0.0
    %v429 = vand.u32 %v23, 4294901760
    %430 = vmatmul.mubr.f32.gmra.mrb[0].mxu0 %v429
    %v431 = vpop.f32.mrb[0].mxu0
    %v432 = vadd.f32 %v349, %v431
    %v433 = vpop.f32.mrb[0].mxu0
    %434 = vdwg.mxu0
    %435 = vmatprep.subr.mxu0 0.0
    %v436 = vand.u32 %v16, 4294901760
    %437 = vmatpush1.msra.mxu0 %v436
    %438 = vmatprep.subr.mxu0 0.0
    %v439 = vand.u32 %v17, 4294901760
    %440 = vmatpush1.msra.mxu0 %v439
    %441 = vmatprep.subr.mxu0 0.0
    %v442 = vand.u32 %v18, 4294901760
    %443 = vmatpush1.msra.mxu0 %v442
    %444 = vmatprep.subr.mxu0 0.0
    %v445 = vand.u32 %v19, 4294901760
    %446 = vmatpush1.msra.mxu0 %v445
    %447 = vmatprep.subr.mxu0 0.0
    %448 = vmatpush1.msra.mxu0 0.0
    %449 = vmatprep.subr.mxu0 0.0
    %450 = vmatpush1.msra.mxu0 0.0
    %451 = vmatprep.subr.mxu0 0.0
    %452 = vmatpush1.msra.mxu0 0.0
    %453 = vmatprep.subr.mxu0 0.0
    %454 = vmatpush1.msra.mxu0 0.0
    %455 = vmatprep.subr.mxu0 0.0
    %456 = vmatpush1.msra.mxu0 0.0
    %457 = vmatprep.subr.mxu0 0.0
    %458 = vmatpush1.msra.mxu0 0.0
    %459 = vmatprep.subr.mxu0 0.0
    %460 = vmatpush1.msra.mxu0 0.0
    %461 = vmatprep.subr.mxu0 0.0
    %462 = vmatpush1.msra.mxu0 0.0
    %463 = vmatprep.subr.mxu0 0.0
    %464 = vmatpush1.msra.mxu0 0.0
    %465 = vmatprep.subr.mxu0 0.0
    %466 = vmatpush1.msra.mxu0 0.0
    %467 = vmatprep.subr.mxu0 0.0
    %468 = vmatpush1.msra.mxu0 0.0
    %469 = vmatprep.subr.mxu0 0.0
    %470 = vmatpush1.msra.mxu0 0.0
    %471 = vmatprep.subr.mxu0 0.0
    %472 = vmatpush1.msra.mxu0 0.0
    %473 = vmatprep.subr.mxu0 0.0
    %474 = vmatpush1.msra.mxu0 0.0
    %475 = vmatprep.subr.mxu0 0.0
    %476 = vmatpush1.msra.mxu0 0.0
    %477 = vmatprep.subr.mxu0 0.0
    %478 = vmatpush1.msra.mxu0 0.0
    %479 = vmatprep.subr.mxu0 0.0
    %480 = vmatpush1.msra.mxu0 0.0
    %481 = vmatprep.subr.mxu0 0.0
    %482 = vmatpush1.msra.mxu0 0.0
    %483 = vmatprep.subr.mxu0 0.0
    %484 = vmatpush1.msra.mxu0 0.0
    %485 = vmatprep.subr.mxu0 0.0
    %486 = vmatpush1.msra.mxu0 0.0
    %487 = vmatprep.subr.mxu0 0.0
    %488 = vmatpush1.msra.mxu0 0.0
    %489 = vmatprep.subr.mxu0 0.0
    %490 = vmatpush1.msra.mxu0 0.0
    %491 = vmatprep.subr.mxu0 0.0
    %492 = vmatpush1.msra.mxu0 0.0
    %493 = vmatprep.subr.mxu0 0.0
    %494 = vmatpush1.msra.mxu0 0.0
    %495 = vmatprep.subr.mxu0 0.0
    %496 = vmatpush1.msra.mxu0 0.0
    %497 = vmatprep.subr.mxu0 0.0
    %498 = vmatpush1.msra.mxu0 0.0
    %499 = vmatprep.subr.mxu0 0.0
    %500 = vmatpush1.msra.mxu0 0.0
    %501 = vmatprep.subr.mxu0 0.0
    %502 = vmatpush1.msra.mxu0 0.0
    %503 = vmatprep.mubr.f32.mxu0 0.0
    %v504 = vand.u32 %v23, 4294901760
    %505 = vmatmul.mubr.f32.gmra.mrb[0].mxu0 %v504
    %v506 = vpop.f32.mrb[0].mxu0
    %v507 = vadd.f32 %v432, %v506
    %v508 = vpop.f32.mrb[0].mxu0
    %509 = vdwg.mxu0
    %vm510 = vcmask 130048
    %v511 = vsel %vm510, %v507, -inf
    %v512 = vrot.slane %v511, 4
    %v513 = vmax.f32 %v511, %v512
    %v514 = vrot.slane %v513, 2
    %v515 = vmax.f32 %v513, %v514
    %v516 = vrot.slane %v515, 1
    %v517 = vmax.f32 %v515, %v516
    %v518 = vsub.f32 %v507, %v517
    %v519 = vmul.f32 %v518, 1.442695
    %v520 = vpow.pop %v519
    %v521 = vsel %vm510, %v520, 0.0
    %v522 = vrot.slane %v521, 4
    %v523 = vadd.f32 %v521, %v522
    %v524 = vrot.slane %v523, 2
    %v525 = vadd.f32 %v523, %v524
    %v526 = vrot.slane %v525, 1
    %v527 = vadd.f32 %v525, %v526
    %v528 = vlog2.pop %v527
    %v529 = vmul.f32 %v528, 0.6931472
    %v530 = vsub.f32 %v518, %v529
    %531 = vst.msk [vmem:[#allocation2] sm:$0xff] %vm510, %v530
    // Predicated region
    $region14: #{tpu_custom_call.1} parent=1 // pred_check
      _
    $region15: #{tpu_custom_call.1} parent=1 // pred_check_branch
      %533 = sbr.rel (0) target = $region17
    $region16: #{tpu_custom_call.1} parent=1 // pred_region
      %s535 = ssub.s32 128, 128
      %536 = vsyncadd [#allocation3], %s535
      %s538 = sshll.u32 [#allocation2], 4
      %s539 = int_to_ptr.vmem [resolvable:$true] %s538
      %541 = dma.vmem_to_hbm [thread:$0]  %s539, 128, %s3, [#allocation3]
    $region17: #{tpu_custom_call.1} parent=1 // pred_fallthru
      _
    // Predicated region
    $region18: #{tpu_custom_call.1} parent=1 // pred_check
      _
    $region19: #{tpu_custom_call.1} parent=1 // pred_check_branch
      %543 = sbr.rel (0) target = $region21
    $region20: #{tpu_custom_call.1} parent=1 // pred_region
      %544 = dma.done [#allocation3], 128
    $region21: #{tpu_custom_call.1} parent=1 // pred_fallthru
      _
    %545 = vsyncpa [#allocation3], 1

</llo_original>
